<compile_context>
chip_gen: v6e
topology: v6e:2x2x1
jax: 0.10.0
libtpu: 0.0.40
codegen_flags: <defaults>
</compile_context>

<pallas_src>
import functools
import math

import jax
import jax.numpy as jnp
from jax.experimental import pallas as pl
from jax.experimental.pallas import tpu as pltpu


def _linear_kernel(x_ref, w_ref, h_ref):
    # h = x @ W for one row tile of nodes; W stays VMEM-resident.
    h_ref[...] = jnp.dot(
        x_ref[...], w_ref[...], preferred_element_type=jnp.float32
    ).astype(h_ref.dtype)


def _gat_attention_kernel(f1_ref, f2_ref, adj_ref, h_ref, out_ref, *, alpha, concat):
    # f1:  (TM, 1)    source attention scores for this row tile
    # f2:  (1, N)     destination attention scores for all nodes (lane-dense)
    # adj: (TM, N)    adjacency row tile
    # h:   (N, Fout)  projected features (full, VMEM resident)
    e = f1_ref[...] + f2_ref[...]                               # (TM, N)
    e = jnp.where(e > 0, e, jnp.float32(alpha) * e)             # LeakyReLU
    masked = jnp.where(adj_ref[...] > 0, e, jnp.float32(-9e15))
    # numerically-stable row softmax (matches F.softmax)
    m = jnp.max(masked, axis=1, keepdims=True)
    p = jnp.exp(masked - m)
    attn = p / jnp.sum(p, axis=1, keepdims=True)
    # TODO(synk): attention dropout (F.dropout) omitted -- eval/inference path.
    h_prime = jnp.dot(attn, h_ref[...], preferred_element_type=jnp.float32)
    if concat:
        # ELU(x) = x if x > 0 else exp(x) - 1
        h_prime = jnp.where(
            h_prime > 0, h_prime, jnp.exp(jnp.minimum(h_prime, 0.0)) - 1.0
        )
    out_ref[...] = h_prime.astype(out_ref.dtype)


def _pick_row_tile(n_pad):
    for cand in (512, 256, 128, 64, 32, 16, 8):
        if n_pad % cand == 0:
            return cand
    return n_pad


def gat_layer_forward(x, adj, W, a, *, alpha, concat=True):
    """Pallas implementation of GraphAttentionLayer.forward (eval mode)."""
    N, Fin = x.shape
    Fin_w, Fout = W.shape
    assert Fin == Fin_w
    assert a.shape == (2 * Fout, 1)

    x = x.astype(jnp.float32)
    adj = adj.astype(jnp.float32)
    W = W.astype(jnp.float32)
    a = a.astype(jnp.float32)

    # Pad node count to a sublane multiple; padded rows/cols are zero so the
    # extra columns are fully masked in the softmax and padded rows dropped.
    n_pad = ((N + 7) // 8) * 8
    pad = n_pad - N
    x_p = jnp.pad(x, ((0, pad), (0, 0)))
    adj_p = jnp.pad(adj, ((0, pad), (0, pad)))

    tm = _pick_row_tile(n_pad)
    grid = (n_pad // tm,)
    cparams = pltpu.CompilerParams(
        dimension_semantics=("parallel",),
        vmem_limit_bytes=64 * 1024 * 1024,
    )

    # --- stage 1: h = x @ W (row-tiled, MXU) --------------------------------
    h = pl.pallas_call(
        _linear_kernel,
        out_shape=jax.ShapeDtypeStruct((n_pad, Fout), jnp.float32),
        grid_spec=pltpu.PrefetchScalarGridSpec(
            num_scalar_prefetch=0,
            grid=grid,
            in_specs=[
                pl.BlockSpec((tm, Fin), lambda i: (i, 0)),
                pl.BlockSpec((Fin, Fout), lambda i: (0, 0)),
            ],
            out_specs=pl.BlockSpec((tm, Fout), lambda i: (i, 0)),
        ),
        compiler_params=cparams,
    )(x_p, W)

    # --- XLA glue: per-node attention projections (O(N*Fout), trivial) -----
    a1 = a[:Fout, 0]
    a2 = a[Fout:, 0]
    f1 = (h @ a1).reshape(n_pad, 1)   # source term, row-tiled into the kernel
    f2 = (h @ a2).reshape(1, n_pad)   # destination term, lane-dense full row

    # --- stage 2: masked softmax attention + aggregation -------------------
    out_p = pl.pallas_call(
        functools.partial(
            _gat_attention_kernel, alpha=float(alpha), concat=bool(concat)
        ),
        out_shape=jax.ShapeDtypeStruct((n_pad, Fout), jnp.float32),
        grid_spec=pltpu.PrefetchScalarGridSpec(
            num_scalar_prefetch=0,
            grid=grid,
            in_specs=[
                pl.BlockSpec((tm, 1), lambda i: (i, 0)),        # f1 row tile
                pl.BlockSpec((1, n_pad), lambda i: (0, 0)),     # f2 (full)
                pl.BlockSpec((tm, n_pad), lambda i: (i, 0)),    # adj row tile
                pl.BlockSpec((n_pad, Fout), lambda i: (0, 0)),  # h (full)
            ],
            out_specs=pl.BlockSpec((tm, Fout), lambda i: (i, 0)),
        ),
        compiler_params=cparams,
    )(f1, f2, adj_p, h)

    return out_p[:N]


def gat_reference(x, adj, W, a, *, alpha, concat=True):
    """Pure-JAX reference mirroring the PyTorch forward."""
    h = x @ W
    N = h.shape[0]
    Fout = W.shape[1]
    a_input = jnp.concatenate(
        [jnp.repeat(h, N, axis=0), jnp.tile(h, (N, 1))], axis=1
    ).reshape(N, N, 2 * Fout)
    e = jax.nn.leaky_relu(jnp.squeeze(a_input @ a, axis=2), negative_slope=alpha)
    attention = jnp.where(adj > 0, e, -9e15)
    attention = jax.nn.softmax(attention, axis=1)
    h_prime = attention @ h
    return jax.nn.elu(h_prime) if concat else h_prime


def init_gat_params(key, in_features, out_features, gain=1.414):
    """Deterministic xavier_uniform_ init (matching torch fan conventions)."""
    k_w, k_a = jax.random.split(key)
    bound_w = gain * math.sqrt(6.0 / (in_features + out_features))
    W = jax.random.uniform(
        k_w, (in_features, out_features), jnp.float32, -bound_w, bound_w
    )
    # torch xavier on a (2*Fout, 1) tensor: fan_in = 1, fan_out = 2*Fout
    bound_a = gain * math.sqrt(6.0 / (1 + 2 * out_features))
    a = jax.random.uniform(
        k_a, (2 * out_features, 1), jnp.float32, -bound_a, bound_a
    )
    return W, a


if __name__ == "__main__":
    N, in_features, out_features = 8, 16, 32
    alpha = 0.2
    concat = True

    key = jax.random.PRNGKey(0)
    k_p, k_x, k_adj = jax.random.split(key, 3)
    W, a = init_gat_params(k_p, in_features, out_features)
    x = jax.random.normal(k_x, (N, in_features), dtype=jnp.float32)
    adj = (jax.random.uniform(k_adj, (N, N)) > 0.5).astype(jnp.float32)
    adj = jnp.maximum(adj, jnp.eye(N, dtype=jnp.float32))  # self-loops

    out = gat_layer_forward(x, adj, W, a, alpha=alpha, concat=concat)
    out = jax.block_until_ready(out)

    ref = gat_reference(x, adj, W, a, alpha=alpha, concat=concat)
    assert out.shape == (N, out_features)
    assert jnp.allclose(out, ref, atol=1e-5, rtol=1e-5), float(
        jnp.max(jnp.abs(out - ref))
    )

    print("KERNEL_OK")
</pallas_src>

<mosaic_0001>
module attributes {stable_mosaic.version = 11 : i64} {
  func.func @_linear_kernel(%arg0: i32, %arg1: memref<8x16xf32, #tpu.memory_space<vmem>>, %arg2: memref<16x32xf32, #tpu.memory_space<vmem>>, %arg3: memref<8x32xf32, #tpu.memory_space<vmem>>) attributes {dimension_semantics = [#tpu.dimension_semantics<parallel>], iteration_bounds = array<i64: 1>, scalar_prefetch = 0 : i64, scratch_operands = 0 : i64, tpu.core_type = #tpu.core_type<tc>, window_params = [{transform_indices = @transform_0, window_bounds = array<i64: 8, 16>}, {pipeline_mode = #tpu.pipeline_mode<synchronous>, transform_indices = @transform_1, window_bounds = array<i64: 16, 32>}, {transform_indices = @transform_2, window_bounds = array<i64: 8, 32>}]} {
    %c0 = arith.constant 0 : index
    %c0_0 = arith.constant 0 : index
    %0 = vector.load %arg1[%c0, %c0_0] : memref<8x16xf32, #tpu.memory_space<vmem>>, vector<8x16xf32>
    %c0_1 = arith.constant 0 : index
    %c0_2 = arith.constant 0 : index
    %1 = vector.load %arg2[%c0_1, %c0_2] : memref<16x32xf32, #tpu.memory_space<vmem>>, vector<16x32xf32>
    %cst = arith.constant dense<0.000000e+00> : vector<8x32xf32>
    %2 = tpu.matmul %0, %1, %cst {dimension_numbers = #tpu.dot_dimension_numbers<[1], [0], [0], [1], [0, 0, 1, 1], [], []>} : vector<8x16xf32>, vector<16x32xf32>, vector<8x32xf32> -> vector<8x32xf32>
    %c0_3 = arith.constant 0 : index
    %c0_4 = arith.constant 0 : index
    %3 = vector.load %arg3[%c0_3, %c0_4] : memref<8x32xf32, #tpu.memory_space<vmem>>, vector<8x32xf32>
    tpu.vector_store %arg3[%c0_3, %c0_4], %2 {strides = array<i32>} : memref<8x32xf32, #tpu.memory_space<vmem>>, vector<8x32xf32>,
    return
  }
  func.func @transform_0(%arg0: i32) -> (i32, i32) {
    %c0_i32 = arith.constant 0 : i32
    %c0_i32_0 = arith.constant 0 : i32
    return %arg0, %c0_i32 : i32, i32
  }
  func.func @transform_1(%arg0: i32) -> (i32, i32) {
    %c0_i32 = arith.constant 0 : i32
    %c0_i32_0 = arith.constant 0 : i32
    %c0_i32_1 = arith.constant 0 : i32
    return %c0_i32, %c0_i32_0 : i32, i32
  }
  func.func @transform_2(%arg0: i32) -> (i32, i32) {
    %c0_i32 = arith.constant 0 : i32
    %c0_i32_0 = arith.constant 0 : i32
    return %arg0, %c0_i32 : i32, i32
  }
}

</mosaic_0001>

<llo_original>
// kernel: tpu_custom_call.1
$region0: #{tpu_custom_call.1}
  #allocation0 [shape = 'u32[]', space=smem, size = 0x4, offset = 0x4, fixed_abs, tag = 'smem constant byte address 0x4 - core index']
  #allocation1 [shape = 'u32[144,128]{1,0:T(1,128)}', space=vmem, size = 0x12000, scoped, tag = 'internal scratch']
  %s0 = inlined_call_operand.hbm [shape: f32[8,16], index: 0, kind: input, shape index: {}]
  %s1 = inlined_call_operand.hbm [shape: f32[16,32], index: 1, kind: input, shape index: {}]
  %s2 = inlined_call_operand.hbm [shape: f32[8,32], index: 2, kind: output, shape index: {}]
  %s3 = sld [smem:[#allocation0]]
  $region26: #{tpu_custom_call.1} parent=0
    _
  %s5 = ssub.s32 1, %s3
  %s6 = scalar_select 0, %s5, %s3
  $region1: #{tpu_custom_call.1} parent=0
    #allocation2 [shape = 'u8[4096]{0}', space=vmem, size = 0x1000, scoped, tag = 'input window, operand 0, single buffered']
    #allocation3 [shape = 's32[1]{0}', space=sflag, size = 0x4, scoped, tag = 'scoped memory for tpu_custom_call.1']
    #allocation4 [shape = 's32[1]{0}', space=sflag, size = 0x4, scoped, tag = 'scoped memory for tpu_custom_call.1']
    #allocation5 [shape = 'u8[8192]{0}', space=vmem, size = 0x2000, scoped, tag = 'input window, operand 1, single buffered']
    #allocation6 [shape = 's32[1]{0}', space=sflag, size = 0x4, scoped, tag = 'scoped memory for tpu_custom_call.1']
    #allocation7 [shape = 'u8[4096]{0}', space=vmem, size = 0x1000, scoped, tag = 'output window, operand 0, single buffered']
    %7 = vsyncpa [#allocation3], 0
    %8 = vsyncpa [#allocation6], 0
    %9 = vsyncpa [#allocation4], 0
    // Predicated region
    $region2: #{tpu_custom_call.1} parent=1 // pred_check
      _
    $region3: #{tpu_custom_call.1} parent=1 // pred_check_branch
      %11 = sbr.rel (0) target = $region5
    $region4: #{tpu_custom_call.1} parent=1 // pred_region
      %s13 = ssub.s32 128, 128
      %14 = vsyncadd [#allocation3], %s13
      %s16 = sshll.u32 [#allocation2], 4
      %s17 = int_to_ptr.vmem [resolvable:$true] %s16
      %19 = dma.hbm_to_vmem [thread:$0]  %s0, 128, %s17, [#allocation3]
    $region5: #{tpu_custom_call.1} parent=1 // pred_fallthru
      _
    // Predicated region
    $region6: #{tpu_custom_call.1} parent=1 // pred_check
      _
    $region7: #{tpu_custom_call.1} parent=1 // pred_check_branch
      %21 = sbr.rel (0) target = $region9
    $region8: #{tpu_custom_call.1} parent=1 // pred_region
      %s23 = ssub.s32 256, 256
      %24 = vsyncadd [#allocation6], %s23
      %s25 = sshll.u32 [#allocation5], 4
      %s26 = int_to_ptr.vmem [resolvable:$true] %s25
      %31 = dma.hbm_to_vmem [thread:$0]  %s1, 256, %s26, [#allocation6], 128, 128, 8
    $region9: #{tpu_custom_call.1} parent=1 // pred_fallthru
      _
    // Predicated region
    $region10: #{tpu_custom_call.1} parent=1 // pred_check
      _
    $region11: #{tpu_custom_call.1} parent=1 // pred_check_branch
      %33 = sbr.rel (0) target = $region13
    $region12: #{tpu_custom_call.1} parent=1 // pred_region
      %34 = dma.done [#allocation3], 128
    $region13: #{tpu_custom_call.1} parent=1 // pred_fallthru
      _
    // Predicated region
    $region14: #{tpu_custom_call.1} parent=1 // pred_check
      _
    $region15: #{tpu_custom_call.1} parent=1 // pred_check_branch
      %36 = sbr.rel (0) target = $region17
    $region16: #{tpu_custom_call.1} parent=1 // pred_region
      %37 = dma.done [#allocation6], 256
    $region17: #{tpu_custom_call.1} parent=1 // pred_fallthru
      _
    %v38 = vld [vmem:[#allocation2] sm:$0xff]
    %v39 = vld [vmem:[#allocation5] sm:$0xff]
    %v40 = vld [vmem:[#allocation5 + $0x8] sm:$0xff]
    %vm41 = vcmask 130048
    %v43 = vsel %vm41, %v38, 0
    %45 = vmatprep.subr.mxu0 0.0
    %46 = vmatpush1.msra.mxu0 0.0
    %47 = vmatprep.subr.mxu0 0.0
    %48 = vmatpush1.msra.mxu0 0.0
    %49 = vmatprep.subr.mxu0 0.0
    %50 = vmatpush1.msra.mxu0 0.0
    %51 = vmatprep.subr.mxu0 0.0
    %52 = vmatpush1.msra.mxu0 0.0
    %53 = vmatprep.subr.mxu0 0.0
    %54 = vmatpush1.msra.mxu0 0.0
    %55 = vmatprep.subr.mxu0 0.0
    %56 = vmatpush1.msra.mxu0 0.0
    %57 = vmatprep.subr.mxu0 0.0
    %58 = vmatpush1.msra.mxu0 0.0
    %59 = vmatprep.subr.mxu0 0.0
    %60 = vmatpush1.msra.mxu0 0.0
    %61 = vmatprep.subr.mxu0 0.0
    %62 = vmatpush1.msra.mxu0 0.0
    %63 = vmatprep.subr.mxu0 0.0
    %64 = vmatpush1.msra.mxu0 0.0
    %65 = vmatprep.subr.mxu0 0.0
    %66 = vmatpush1.msra.mxu0 0.0
    %67 = vmatprep.subr.mxu0 0.0
    %68 = vmatpush1.msra.mxu0 0.0
    %69 = vmatprep.subr.mxu0 0.0
    %70 = vmatpush1.msra.mxu0 0.0
    %71 = vmatprep.subr.mxu0 0.0
    %72 = vmatpush1.msra.mxu0 0.0
    %73 = vmatprep.subr.mxu0 0.0
    %74 = vmatpush1.msra.mxu0 %v40
    %75 = vmatprep.subr.mxu0 0.0
    %76 = vmatpush1.msra.mxu0 %v39
    %77 = vmatprep.subr.mxu0 0.0
    %78 = vmatpush2.msra.mxu0 0.0
    %79 = vmatprep.subr.mxu0 0.0
    %80 = vmatpush2.msra.mxu0 0.0
    %81 = vmatprep.subr.mxu0 0.0
    %82 = vmatpush2.msra.mxu0 0.0
    %83 = vmatprep.subr.mxu0 0.0
    %84 = vmatpush2.msra.mxu0 0.0
    %85 = vmatprep.subr.mxu0 0.0
    %86 = vmatpush2.msra.mxu0 0.0
    %87 = vmatprep.subr.mxu0 0.0
    %88 = vmatpush2.msra.mxu0 0.0
    %89 = vmatprep.subr.mxu0 0.0
    %90 = vmatpush2.msra.mxu0 0.0
    %91 = vmatprep.subr.mxu0 0.0
    %92 = vmatpush2.msra.mxu0 0.0
    %93 = vmatprep.subr.mxu0 0.0
    %94 = vmatpush2.msra.mxu0 0.0
    %95 = vmatprep.subr.mxu0 0.0
    %96 = vmatpush2.msra.mxu0 0.0
    %97 = vmatprep.subr.mxu0 0.0
    %98 = vmatpush2.msra.mxu0 0.0
    %99 = vmatprep.subr.mxu0 0.0
    %100 = vmatpush2.msra.mxu0 0.0
    %101 = vmatprep.subr.mxu0 0.0
    %102 = vmatpush2.msra.mxu0 0.0
    %103 = vmatprep.subr.mxu0 0.0
    %104 = vmatpush2.msra.mxu0 0.0
    %105 = vmatprep.subr.mxu0 0.0
    %106 = vmatpush2.msra.mxu0 0.0
    %107 = vmatprep.subr.mxu0 0.0
    %108 = vmatpush2.msra.mxu0 0.0
    %109 = vmatprep.mubr.f32.mxu0 0.0
    %110 = vmatmul.mubr.f32.gmra.mxu0 %v43
    %v111 = vpop.f32.mrf.mxu0
    %v112 = vadd.f32 0.0, %v111
    %v113 = vpop.f32.mrf.mxu0
    %114 = vdwg.mxu0
    %vm115 = vcmask 261120
    %116 = vst.msk [vmem:[#allocation7] sm:$0xff] %vm115, %v112
    // Predicated region
    $region18: #{tpu_custom_call.1} parent=1 // pred_check
      _
    $region19: #{tpu_custom_call.1} parent=1 // pred_check_branch
      %118 = sbr.rel (0) target = $region21
    $region20: #{tpu_custom_call.1} parent=1 // pred_region
      %s120 = ssub.s32 128, 128
      %121 = vsyncadd [#allocation4], %s120
      %s123 = sshll.u32 [#allocation7], 4
      %s124 = int_to_ptr.vmem [resolvable:$true] %s123
      %126 = dma.vmem_to_hbm [thread:$0]  %s124, 128, %s2, [#allocation4]
    $region21: #{tpu_custom_call.1} parent=1 // pred_fallthru
      _
    // Predicated region
    $region22: #{tpu_custom_call.1} parent=1 // pred_check
      _
    $region23: #{tpu_custom_call.1} parent=1 // pred_check_branch
      %128 = sbr.rel (0) target = $region25
    $region24: #{tpu_custom_call.1} parent=1 // pred_region
      %129 = dma.done [#allocation4], 128
    $region25: #{tpu_custom_call.1} parent=1 // pred_fallthru
      _
    %130 = vsyncpa [#allocation3], 1
    %131 = vsyncpa [#allocation6], 1
    %132 = vsyncpa [#allocation4], 1

</llo_original>
